<compile_context>
chip_gen: v7x
topology: tpu7x:2x2x1
jax: 0.10.0
libtpu: 0.0.40
codegen_flags: <defaults>
</compile_context>

<pallas_src>
import jax
import jax.numpy as jnp
from jax.experimental import pallas as pl
from jax.experimental.pallas import tpu as pltpu

F_IN, F_HID, F_OUT = 22, 8, 6


def _round_up(x: int, m: int) -> int:
    return ((x + m - 1) // m) * m


def _choose_tile(n: int, tile_n: int) -> int:
    """Batch tile: multiple of 128, <= 65536, grid >= 2 when N is big enough."""
    n = max(int(n), 1)
    tile = min(int(tile_n), _round_up(n, 128))
    tile = max(128, (tile // 128) * 128)       # robust to non-128-multiple user values
    tile = min(tile, 65536)                    # ~7 MB double-buffered VMEM worst case
    # Keep at least 2 grid steps so ("parallel",) can shard across v7x's 2 TCs.
    if n > 128 and pl.cdiv(n, tile) < 2:
        tile = max(128, _round_up(pl.cdiv(n, 2), 128))
    assert tile % 128 == 0
    return tile


def _mlp_kernel(x_ref, w1_ref, b1_ref, w2_ref, b2_ref, o_ref):
    # x_ref: (22, TILE) bf16 — batch on the lane axis (lane-dense loads/stores).
    x = x_ref[...]
    # (8, TILE) = (8, 22) @ (22, TILE); f32 accumulation on the MXU.
    h = jnp.dot(w1_ref[...], x, preferred_element_type=jnp.float32) + b1_ref[...]
    h = jnp.maximum(h, 0.0)                                     # ReLU
    # Second stage stays f32 (K = 8 — negligible; avoids an extra rounding step).
    y = jnp.dot(w2_ref[...], h, preferred_element_type=jnp.float32) + b2_ref[...]
    # LeakyReLU, negative_slope = 0.01 (PyTorch default).
    o_ref[...] = jnp.where(y > 0.0, y, 0.01 * y).astype(o_ref.dtype)


def digits_convnet_feature_major(x_t, w1, b1, w2, b2, *, tile_n=32768):
    """Zero-wrapper-pass entry point.

    x_t : (22, N) feature-major activations (any float dtype; cast to bf16).
    w1  : (8, 22)   b1: (8, 1) or (8,)     (PyTorch (out, in) layout)
    w2  : (6, 8)    b2: (6, 1) or (6,)
    Returns (6, N) bf16, feature-major.
    """
    f_in, n = x_t.shape
    assert f_in == F_IN, f_in
    tile = _choose_tile(n, tile_n)
    grid = (pl.cdiv(n, tile),)

    w1b = w1.astype(jnp.bfloat16)                 # match bf16 activations on the MXU
    b1f = b1.reshape(F_HID, 1).astype(jnp.float32)
    w2f = w2.astype(jnp.float32)                  # tiny; second stage is f32
    b2f = b2.reshape(F_OUT, 1).astype(jnp.float32)

    cost = pl.CostEstimate(
        flops=2 * n * (F_IN * F_HID + F_HID * F_OUT),
        transcendentals=0,
        bytes_accessed=n * (F_IN * 2 + F_OUT * 2)
        + F_IN * F_HID * 2 + F_HID * F_OUT * 4 + (F_HID + F_OUT) * 4,
    )

    return pl.pallas_call(
        _mlp_kernel,
        out_shape=jax.ShapeDtypeStruct((F_OUT, n), jnp.bfloat16),
        grid=grid,
        in_specs=[
            pl.BlockSpec((F_IN, tile), lambda i: (0, i)),    # x^T tile (streamed)
            pl.BlockSpec((F_HID, F_IN), lambda i: (0, 0)),   # W1 (resident)
            pl.BlockSpec((F_HID, 1), lambda i: (0, 0)),      # b1 (resident)
            pl.BlockSpec((F_OUT, F_HID), lambda i: (0, 0)),  # W2 (resident)
            pl.BlockSpec((F_OUT, 1), lambda i: (0, 0)),      # b2 (resident)
        ],
        out_specs=pl.BlockSpec((F_OUT, tile), lambda i: (0, i)),
        compiler_params=pltpu.CompilerParams(
            dimension_semantics=("parallel",),               # megacore-shard the batch
            vmem_limit_bytes=32 * 1024 * 1024,               # headroom on v5e's 16 MiB default
        ),
        cost_estimate=cost,
    )(x_t.astype(jnp.bfloat16), w1b, b1f, w2f, b2f)


def digits_convnet_forward(x, w1, b1, w2, b2, *, tile_n=32768):
    """DigitsConvNet.forward with the PyTorch layout: (N, 22) f32 -> (N, 6) f32.

    Exactly one fused transpose+cast HBM pass on the way in and one small one
    on the way out; use `digits_convnet_feature_major` to avoid both.
    """
    n, f_in = x.shape
    assert f_in == F_IN, f_in
    x_t = x.T.astype(jnp.bfloat16)       # single fused transpose+cast pass (no pad)
    out_t = digits_convnet_feature_major(x_t, w1, b1, w2, b2, tile_n=tile_n)
    return out_t.T.astype(jnp.float32)   # (N, 6)


def init_params(key):
    """PyTorch-style init: U(-1/sqrt(fan_in), 1/sqrt(fan_in)), (out, in) layout."""
    k1, k2, k3, k4 = jax.random.split(key, 4)
    bound1 = 1.0 / jnp.sqrt(float(F_IN))          # nn.Linear(22, 8)
    w1 = jax.random.uniform(k1, (F_HID, F_IN), jnp.float32, -bound1, bound1)
    b1 = jax.random.uniform(k2, (F_HID, 1), jnp.float32, -bound1, bound1)
    bound2 = 1.0 / jnp.sqrt(float(F_HID))         # nn.Linear(8, 6)
    w2 = jax.random.uniform(k3, (F_OUT, F_HID), jnp.float32, -bound2, bound2)
    b2 = jax.random.uniform(k4, (F_OUT, 1), jnp.float32, -bound2, bound2)
    return w1, b1, w2, b2


def reference_forward(x, w1, b1, w2, b2):
    """Pure-JAX f32 reference (matches the PyTorch forward)."""
    h = jnp.maximum(x @ w1.T + b1.reshape(1, -1), 0.0)
    y = h @ w2.T + b2.reshape(1, -1)
    return jnp.where(y > 0.0, y, 0.01 * y)


if __name__ == "__main__":
    key = jax.random.PRNGKey(0)
    kx, kp = jax.random.split(key)

    # N is intentionally not a multiple of 128/tile: exercises the ragged last
    # block (uneven final grid step) and the grid>=2 (megacore) path.
    N = 600
    x = jax.random.normal(kx, (N, F_IN), jnp.float32)
    w1, b1, w2, b2 = init_params(kp)

    out = jax.block_until_ready(digits_convnet_forward(x, w1, b1, w2, b2))
    ref = reference_forward(x, w1, b1, w2, b2)
    assert out.shape == (N, F_OUT), out.shape
    # bf16 activations/weights/output on the HBM path -> loosened tolerance.
    assert jnp.allclose(out, ref, atol=5e-2, rtol=5e-2), "mismatch (row-major path)"

    # Zero-wrapper-pass feature-major path: (22, N) bf16 in -> (6, N) bf16 out.
    out_fm = jax.block_until_ready(
        digits_convnet_feature_major(x.T.astype(jnp.bfloat16), w1, b1, w2, b2))
    assert out_fm.shape == (F_OUT, N), out_fm.shape
    assert jnp.allclose(out_fm.T.astype(jnp.float32), ref, atol=5e-2, rtol=5e-2), \
        "mismatch (feature-major path)"

    print("KERNEL_OK")
</pallas_src>

<mosaic_0001>
module attributes {stable_mosaic.version = 11 : i64} {
  func.func @_mlp_kernel(%arg0: i32, %arg1: memref<22x384xbf16, #tpu.memory_space<vmem>>, %arg2: memref<8x22xbf16, #tpu.memory_space<vmem>>, %arg3: memref<8x1xf32, #tpu.memory_space<vmem>>, %arg4: memref<6x8xf32, #tpu.memory_space<vmem>>, %arg5: memref<6x1xf32, #tpu.memory_space<vmem>>, %arg6: memref<6x384xbf16, #tpu.memory_space<vmem>>) attributes {dimension_semantics = [#tpu.dimension_semantics<parallel>], iteration_bounds = array<i64: 2>, scalar_prefetch = 0 : i64, scratch_operands = 0 : i64, tpu.core_type = #tpu.core_type<tc>, window_params = [{transform_indices = @transform_0, window_bounds = array<i64: 22, 384>}, {pipeline_mode = #tpu.pipeline_mode<synchronous>, transform_indices = @transform_1, window_bounds = array<i64: 8, 22>}, {pipeline_mode = #tpu.pipeline_mode<synchronous>, transform_indices = @transform_2, window_bounds = array<i64: 8, 1>}, {pipeline_mode = #tpu.pipeline_mode<synchronous>, transform_indices = @transform_3, window_bounds = array<i64: 6, 8>}, {pipeline_mode = #tpu.pipeline_mode<synchronous>, transform_indices = @transform_4, window_bounds = array<i64: 6, 1>}, {transform_indices = @transform_5, window_bounds = array<i64: 6, 384>}]} {
    %c0 = arith.constant 0 : index
    %c0_0 = arith.constant 0 : index
    %0 = vector.load %arg1[%c0, %c0_0] : memref<22x384xbf16, #tpu.memory_space<vmem>>, vector<22x384xbf16>
    %c0_1 = arith.constant 0 : index
    %c0_2 = arith.constant 0 : index
    %1 = vector.load %arg2[%c0_1, %c0_2] : memref<8x22xbf16, #tpu.memory_space<vmem>>, vector<8x22xbf16>
    %cst = arith.constant dense<0.000000e+00> : vector<8x384xf32>
    %2 = tpu.matmul %1, %0, %cst {dimension_numbers = #tpu.dot_dimension_numbers<[1], [0], [0], [1], [0, 0, 1, 1], [], []>} : vector<8x22xbf16>, vector<22x384xbf16>, vector<8x384xf32> -> vector<8x384xf32>
    %c0_3 = arith.constant 0 : index
    %c0_4 = arith.constant 0 : index
    %3 = vector.load %arg3[%c0_3, %c0_4] : memref<8x1xf32, #tpu.memory_space<vmem>>, vector<8x1xf32>
    %4 = vector.broadcast %3 : vector<8x1xf32> to vector<8x384xf32>
    %5 = arith.addf %2, %4 : vector<8x384xf32>
    %cst_5 = arith.constant 0.000000e+00 : f32
    %6 = vector.broadcast %cst_5 : f32 to vector<8x384xf32>
    %7 = arith.maximumf %5, %6 : vector<8x384xf32>
    %c0_6 = arith.constant 0 : index
    %c0_7 = arith.constant 0 : index
    %8 = vector.load %arg4[%c0_6, %c0_7] : memref<6x8xf32, #tpu.memory_space<vmem>>, vector<6x8xf32>
    %cst_8 = arith.constant dense<0.000000e+00> : vector<6x384xf32>
    %9 = tpu.matmul %8, %7, %cst_8 {dimension_numbers = #tpu.dot_dimension_numbers<[1], [0], [0], [1], [0, 0, 1, 1], [], []>} : vector<6x8xf32>, vector<8x384xf32>, vector<6x384xf32> -> vector<6x384xf32>
    %c0_9 = arith.constant 0 : index
    %c0_10 = arith.constant 0 : index
    %10 = vector.load %arg5[%c0_9, %c0_10] : memref<6x1xf32, #tpu.memory_space<vmem>>, vector<6x1xf32>
    %11 = vector.broadcast %10 : vector<6x1xf32> to vector<6x384xf32>
    %12 = arith.addf %9, %11 : vector<6x384xf32>
    %cst_11 = arith.constant 0.000000e+00 : f32
    %13 = vector.broadcast %cst_11 : f32 to vector<6x384xf32>
    %14 = arith.cmpf ogt, %12, %13 : vector<6x384xf32>
    %cst_12 = arith.constant 0.00999999977 : f32
    %15 = vector.broadcast %cst_12 : f32 to vector<6x384xf32>
    %16 = arith.mulf %15, %12 : vector<6x384xf32>
    %17 = arith.select %14, %12, %16 : vector<6x384xi1>, vector<6x384xf32>
    %18 = arith.truncf %17 : vector<6x384xf32> to vector<6x384xbf16>
    %c0_13 = arith.constant 0 : index
    %c0_14 = arith.constant 0 : index
    %19 = vector.load %arg6[%c0_13, %c0_14] : memref<6x384xbf16, #tpu.memory_space<vmem>>, vector<6x384xbf16>
    tpu.vector_store %arg6[%c0_13, %c0_14], %18 {strides = array<i32>} : memref<6x384xbf16, #tpu.memory_space<vmem>>, vector<6x384xbf16>,
    return
  }
  func.func @transform_0(%arg0: i32) -> (i32, i32) {
    %c0_i32 = arith.constant 0 : i32
    %c0_i32_0 = arith.constant 0 : i32
    return %c0_i32, %arg0 : i32, i32
  }
  func.func @transform_1(%arg0: i32) -> (i32, i32) {
    %c0_i32 = arith.constant 0 : i32
    %c0_i32_0 = arith.constant 0 : i32
    %c0_i32_1 = arith.constant 0 : i32
    return %c0_i32, %c0_i32_0 : i32, i32
  }
  func.func @transform_2(%arg0: i32) -> (i32, i32) {
    %c0_i32 = arith.constant 0 : i32
    %c0_i32_0 = arith.constant 0 : i32
    %c0_i32_1 = arith.constant 0 : i32
    return %c0_i32, %c0_i32_0 : i32, i32
  }
  func.func @transform_3(%arg0: i32) -> (i32, i32) {
    %c0_i32 = arith.constant 0 : i32
    %c0_i32_0 = arith.constant 0 : i32
    %c0_i32_1 = arith.constant 0 : i32
    return %c0_i32, %c0_i32_0 : i32, i32
  }
  func.func @transform_4(%arg0: i32) -> (i32, i32) {
    %c0_i32 = arith.constant 0 : i32
    %c0_i32_0 = arith.constant 0 : i32
    %c0_i32_1 = arith.constant 0 : i32
    return %c0_i32, %c0_i32_0 : i32, i32
  }
  func.func @transform_5(%arg0: i32) -> (i32, i32) {
    %c0_i32 = arith.constant 0 : i32
    %c0_i32_0 = arith.constant 0 : i32
    return %c0_i32, %arg0 : i32, i32
  }
}

</mosaic_0001>

<llo_original>
// kernel: tpu_custom_call.1
$region0: #{tpu_custom_call.1}
  #allocation0 [shape = 'u32[]', space=smem, size = 0x4, offset = 0x4, fixed_abs, tag = 'smem constant byte address 0x4 - core index']
  #allocation1 [shape = 'u32[144,128]{1,0:T(1,128)}', space=vmem, size = 0x12000, scoped, tag = 'internal scratch']
  %s0 = inlined_call_operand.hbm [shape: bf16[22,600], index: 0, kind: input, shape index: {}]
  %s1 = inlined_call_operand.vmem [shape: bf16[8,22], index: 1, kind: input, shape index: {}]
  %s2 = inlined_call_operand.vmem [shape: f32[8,1], index: 2, kind: input, shape index: {}]
  %s3 = inlined_call_operand.vmem [shape: f32[6,8], index: 3, kind: input, shape index: {}]
  %s4 = inlined_call_operand.vmem [shape: f32[6,1], index: 4, kind: input, shape index: {}]
  %s5 = inlined_call_operand.hbm [shape: bf16[6,600], index: 5, kind: output, shape index: {}]
  %s6 = sld [smem:[#allocation0]]
  $region57: #{tpu_custom_call.1} parent=0
    _
  %s8 = ssub.s32 1, %s6
  %s9 = scalar_select 0, %s8, %s6
  $region1: #{tpu_custom_call.1} parent=0
    #allocation2 [shape = 'u8[36864]{0}', space=vmem, size = 0x9000, scoped, tag = 'input window, operand 0']
    #allocation3 [shape = 's32[2]{0}', space=sflag, size = 0x8, scoped, tag = 'scoped memory for tpu_custom_call.1']
    #allocation4 [shape = 's32[2]{0}', space=sflag, size = 0x8, scoped, tag = 'scoped memory for tpu_custom_call.1']
    #allocation5 [shape = 'u8[12288]{0}', space=vmem, size = 0x3000, scoped, tag = 'output window, operand 0']
    %10 = vsyncpa [#allocation3], 0
    %s11 = scalar_lea.sflag [#allocation3], 1
    %12 = vsyncpa %s11, 0
    %13 = vsyncpa [#allocation4], 0
    %s14 = scalar_lea.sflag [#allocation4], 1
    %15 = vsyncpa %s14, 0
    loop: start=0, step=1, limit=4
    $region2: #{tpu_custom_call.1} parent=1 // loop_pre_header
      _
    $region3: #{tpu_custom_call.1} parent=1 // loop_header
      %s17 = sphi 0, %s21
      %p18 = scmp.ge.s32.totalorder %s17, 4
      %s27 = sphi 0, %s29
      %s30 = sphi 0, %s27
      %s31 = sphi 0, %s30
      %s47 = sphi 0, %s31
      %s51 = sphi 0, %s51
      %s53 = sphi 0, %s51
      %s54 = sphi 0, %s53
      %s68 = sphi 0, %s54
      %s72 = sphi 0, %s72
      %s74 = sphi 0, %s72
      %s75 = sphi 0, %s74
      %s89 = sphi 0, %s75
      %s93 = sphi 0, %s93
      %s95 = sphi 0, %s93
      %s96 = sphi 0, %s95
      %s110 = sphi 0, %s96
      %s114 = sphi 0, %s114
      %s116 = sphi 0, %s114
      %s117 = sphi 0, %s116
      %s131 = sphi 0, %s117
      %s137 = sphi 0, %s139
      %s140 = sphi 0, %s137
      %s141 = sphi 0, %s140
      %s157 = sphi 0, %s141
    $region4: #{tpu_custom_call.1} parent=1 // loop_header_branch
      %20 = sbr.rel (%p18) target = $region8
    $region5: #{tpu_custom_call.1} parent=1 // loop_body
      %s22 = ssub.s32 %s17, 1
      %s23 = ssub.s32 %s17, 2
      %s24 = sadd.s32 %s17, 1
      %s25 = ssub.s32 %s17, %s24
      %p26 = scmp.eq.s32.totalorder %s25, 0
      %s28 = sadd.s32 %s27, 1
      %s29 = scalar_select %p26, %s27, %s28
      %p32 = pneg %p26
      %p33 = scmp.eq.s32.totalorder %s17, 1
      %p34 = por %p32, %p33
      %p35 = scmp.ne.s32.totalorder %s27, %s30
      %p36 = scmp.eq.s32.totalorder %s17, 0
      %p37 = por %p35, %p36
      %p38 = scmp.ne.s32.totalorder %s27, %s30
      %p39 = scmp.eq.s32.totalorder %s22, 1
      %p40 = por %p38, %p39
      %p41 = scmp.ne.s32.totalorder %s30, %s31
      %p42 = scmp.eq.s32.totalorder %s22, 0
      %p43 = por %p41, %p42
      %p44 = scmp.ne.s32.totalorder %s30, %s31
      %p45 = scmp.eq.s32.totalorder %s23, 1
      %p46 = por %p44, %p45
      %p48 = scmp.ne.s32.totalorder %s31, %s47
      %p49 = scmp.eq.s32.totalorder %s23, 0
      %p50 = por %p48, %p49
      %s52 = sadd.s32 %s51, 1
      %p55 = scmp.eq.s32.totalorder %s17, 1
      %p56 = scmp.ne.s32.totalorder %s51, %s53
      %p57 = scmp.eq.s32.totalorder %s17, 0
      %p58 = por %p56, %p57
      %p59 = scmp.ne.s32.totalorder %s51, %s53
      %p60 = scmp.eq.s32.totalorder %s22, 1
      %p61 = por %p59, %p60
      %p62 = scmp.ne.s32.totalorder %s53, %s54
      %p63 = scmp.eq.s32.totalorder %s22, 0
      %p64 = por %p62, %p63
      %p65 = scmp.ne.s32.totalorder %s53, %s54
      %p66 = scmp.eq.s32.totalorder %s23, 1
      %p67 = por %p65, %p66
      %p69 = scmp.ne.s32.totalorder %s54, %s68
      %p70 = scmp.eq.s32.totalorder %s23, 0
      %p71 = por %p69, %p70
      %s73 = sadd.s32 %s72, 1
      %p76 = scmp.eq.s32.totalorder %s17, 1
      %p77 = scmp.ne.s32.totalorder %s72, %s74
      %p78 = scmp.eq.s32.totalorder %s17, 0
      %p79 = por %p77, %p78
      %p80 = scmp.ne.s32.totalorder %s72, %s74
      %p81 = scmp.eq.s32.totalorder %s22, 1
      %p82 = por %p80, %p81
      %p83 = scmp.ne.s32.totalorder %s74, %s75
      %p84 = scmp.eq.s32.totalorder %s22, 0
      %p85 = por %p83, %p84
      %p86 = scmp.ne.s32.totalorder %s74, %s75
      %p87 = scmp.eq.s32.totalorder %s23, 1
      %p88 = por %p86, %p87
      %p90 = scmp.ne.s32.totalorder %s75, %s89
      %p91 = scmp.eq.s32.totalorder %s23, 0
      %p92 = por %p90, %p91
      %s94 = sadd.s32 %s93, 1
      %p97 = scmp.eq.s32.totalorder %s17, 1
      %p98 = scmp.ne.s32.totalorder %s93, %s95
      %p99 = scmp.eq.s32.totalorder %s17, 0
      %p100 = por %p98, %p99
      %p101 = scmp.ne.s32.totalorder %s93, %s95
      %p102 = scmp.eq.s32.totalorder %s22, 1
      %p103 = por %p101, %p102
      %p104 = scmp.ne.s32.totalorder %s95, %s96
      %p105 = scmp.eq.s32.totalorder %s22, 0
      %p106 = por %p104, %p105
      %p107 = scmp.ne.s32.totalorder %s95, %s96
      %p108 = scmp.eq.s32.totalorder %s23, 1
      %p109 = por %p107, %p108
      %p111 = scmp.ne.s32.totalorder %s96, %s110
      %p112 = scmp.eq.s32.totalorder %s23, 0
      %p113 = por %p111, %p112
      %s115 = sadd.s32 %s114, 1
      %p118 = scmp.eq.s32.totalorder %s17, 1
      %p119 = scmp.ne.s32.totalorder %s114, %s116
      %p120 = scmp.eq.s32.totalorder %s17, 0
      %p121 = por %p119, %p120
      %p122 = scmp.ne.s32.totalorder %s114, %s116
      %p123 = scmp.eq.s32.totalorder %s22, 1
      %p124 = por %p122, %p123
      %p125 = scmp.ne.s32.totalorder %s116, %s117
      %p126 = scmp.eq.s32.totalorder %s22, 0
      %p127 = por %p125, %p126
      %p128 = scmp.ne.s32.totalorder %s116, %s117
      %p129 = scmp.eq.s32.totalorder %s23, 1
      %p130 = por %p128, %p129
      %p132 = scmp.ne.s32.totalorder %s117, %s131
      %p133 = scmp.eq.s32.totalorder %s23, 0
      %p134 = por %p132, %p133
      %s135 = ssub.s32 %s17, %s24
      %p136 = scmp.eq.s32.totalorder %s135, 0
      %s138 = sadd.s32 %s137, 1
      %s139 = scalar_select %p136, %s137, %s138
      %p142 = pneg %p136
      %p143 = scmp.eq.s32.totalorder %s17, 1
      %p144 = por %p142, %p143
      %p145 = scmp.ne.s32.totalorder %s137, %s140
      %p146 = scmp.eq.s32.totalorder %s17, 0
      %p147 = por %p145, %p146
      %p148 = scmp.ne.s32.totalorder %s137, %s140
      %p149 = scmp.eq.s32.totalorder %s22, 1
      %p150 = por %p148, %p149
      %p151 = scmp.ne.s32.totalorder %s140, %s141
      %p152 = scmp.eq.s32.totalorder %s22, 0
      %p153 = por %p151, %p152
      %p154 = scmp.ne.s32.totalorder %s140, %s141
      %p155 = scmp.eq.s32.totalorder %s23, 1
      %p156 = por %p154, %p155
      %p158 = scmp.ne.s32.totalorder %s141, %s157
      %p159 = scmp.eq.s32.totalorder %s23, 0
      %p160 = por %p158, %p159
      %p161 = scmp.le.s32.totalorder 1, %s17
      %p162 = scmp.lt.s32.totalorder %s17, 3
      %p163 = pnand %p161, %p162
      %p164 = pneg %p163
      // Predicated region
      $region9: #{tpu_custom_call.1} parent=5 // pred_check
        _
      $region10: #{tpu_custom_call.1} parent=5 // pred_check_branch
        %166 = sbr.rel (%p163) target = $region12
      $region11: #{tpu_custom_call.1} parent=5 // pred_region
        %s167 = ssub.s32 %s17, 1
        // Predicated region
        $region13: #{tpu_custom_call.1} parent=11 // pred_check
          %p168 = pneg %p64
        $region14: #{tpu_custom_call.1} parent=11 // pred_check_branch
          %170 = sbr.rel (%p168) target = $region16
        $region15: #{tpu_custom_call.1} parent=11 // pred_region
          _
        $region16: #{tpu_custom_call.1} parent=11 // pred_fallthru
          _
        // Predicated region
        $region17: #{tpu_custom_call.1} parent=11 // pred_check
          %p171 = pneg %p85
        $region18: #{tpu_custom_call.1} parent=11 // pred_check_branch
          %173 = sbr.rel (%p171) target = $region20
        $region19: #{tpu_custom_call.1} parent=11 // pred_region
          _
        $region20: #{tpu_custom_call.1} parent=11 // pred_fallthru
          _
        // Predicated region
        $region21: #{tpu_custom_call.1} parent=11 // pred_check
          %p174 = pneg %p106
        $region22: #{tpu_custom_call.1} parent=11 // pred_check_branch
          %176 = sbr.rel (%p174) target = $region24
        $region23: #{tpu_custom_call.1} parent=11 // pred_region
          _
        $region24: #{tpu_custom_call.1} parent=11 // pred_fallthru
          _
        // Predicated region
        $region25: #{tpu_custom_call.1} parent=11 // pred_check
          %p177 = pneg %p127
        $region26: #{tpu_custom_call.1} parent=11 // pred_check_branch
          %179 = sbr.rel (%p177) target = $region28
        $region27: #{tpu_custom_call.1} parent=11 // pred_region
          _
        $region28: #{tpu_custom_call.1} parent=11 // pred_fallthru
          _
      $region12: #{tpu_custom_call.1} parent=5 // pred_fallthru
        _
      %p180 = scmp.lt.s32.totalorder %s17, 2
      // Predicated region
      $region29: #{tpu_custom_call.1} parent=5 // pred_check
        %p181 = pneg %p180
      $region30: #{tpu_custom_call.1} parent=5 // pred_check_branch
        %183 = sbr.rel (%p181) target = $region32
      $region31: #{tpu_custom_call.1} parent=5 // pred_region
        // Predicated region
        $region33: #{tpu_custom_call.1} parent=31 // pred_check
          %p184 = pneg %p37
        $region34: #{tpu_custom_call.1} parent=31 // pred_check_branch
          %186 = sbr.rel (%p184) target = $region36
        $region35: #{tpu_custom_call.1} parent=31 // pred_region
          %s187 = sand.u32 %s27, 1
          %s188 = scalar_lea.sflag [#allocation3], %s187
          %s189 = sand.u32 %s27, 1
          %s190 = smul.addr %s189, 36
          %s191 = scalar_lea.vmem [#allocation2], %s190
          %s192 = smul.u32 3, %s17
          %s193 = ssub.s32 5, %s192
          %p194 = scmp.lt.s32.totalorder %s193, 3
          %s195 = scalar_select %p194, %s193, 3
          %s196 = smul.u32 192, %s195
          %s198 = ssub.s32 576, %s196
          %199 = vsyncadd %s188, %s198
          %p200 = scmp.ne.s32.totalorder 0, %s196
          %s201 = smul.addr %s192, 64
          %s202 = scalar_lea.hbm %s0, %s201
          %s203 = smul.u32 %s195, 4
          %s204 = smul.u32 %s203, 3
          %s205 = sshll.u32 %s191, 4
          %s206 = int_to_ptr.vmem [resolvable:$true] %s205
          %s207 = sshll.u32 %s204, 4
          %211 = dma.hbm_to_vmem [thread:$0]  (%p200), %s202, %s207, %s206, %s188, 320, 192, %s203
        $region36: #{tpu_custom_call.1} parent=31 // pred_fallthru
          _
      $region32: #{tpu_custom_call.1} parent=5 // pred_fallthru
        _
      %p212 = scmp.le.s32.totalorder 1, %s17
      %p213 = scmp.lt.s32.totalorder %s17, 3
      %p214 = pnand %p212, %p213
      %p215 = pneg %p214
      // Predicated region
      $region37: #{tpu_custom_call.1} parent=5 // pred_check
        _
      $region38: #{tpu_custom_call.1} parent=5 // pred_check_branch
        %217 = sbr.rel (%p214) target = $region40
      $region39: #{tpu_custom_call.1} parent=5 // pred_region
        %s218 = ssub.s32 %s17, 1
        %s219 = sand.u32 %s30, 1
        %s220 = scalar_lea.sflag [#allocation3], %s219
        %s221 = sand.u32 %s30, 1
        %s222 = smul.addr %s221, 36
        %s223 = scalar_lea.vmem [#allocation2], %s222
        // Predicated region
        $region41: #{tpu_custom_call.1} parent=39 // pred_check
          %p224 = pneg %p43
        $region42: #{tpu_custom_call.1} parent=39 // pred_check_branch
          %226 = sbr.rel (%p224) target = $region44
        $region43: #{tpu_custom_call.1} parent=39 // pred_region
          %227 = dma.done %s220, 576
        $region44: #{tpu_custom_call.1} parent=39 // pred_fallthru
          _
        %s228 = sand.u32 %s30, 1
        %s229 = scalar_lea.sflag [#allocation3], %s228
        %s230 = sand.u32 %s30, 1
        %s231 = smul.addr %s230, 36
        %s232 = scalar_lea.vmem [#allocation2], %s231
        %p233 = pneg %p43
        %p234 = pneg %p40
        %p235 = pneg %p64
        %p236 = pneg %p61
        %p237 = pneg %p85
        %p238 = pneg %p82
        %p239 = pneg %p106
        %p240 = pneg %p103
        %p241 = pneg %p127
        %p242 = pneg %p124
        %p243 = pneg %p153
        %p244 = pneg %p150
        %s245 = sand.u32 %s140, 1
        %s246 = scalar_lea.sflag [#allocation4], %s245
        %s247 = sand.u32 %s140, 1
        %s248 = smul.addr %s247, 12
        %s249 = scalar_lea.vmem [#allocation5], %s248
        %s250 = smul.u32 3, %s22
        %s251 = ssub.s32 5, %s250
        %p252 = scmp.lt.s32.totalorder %s251, 3
        %s253 = scalar_select %p252, %s251, 3
        %s254 = smul.u32 192, %s253
        %s255 = smul.u32 3, %s22
        %s256 = ssub.s32 5, %s255
        %p257 = scmp.lt.s32.totalorder %s256, 3
        %s258 = scalar_select %p257, %s256, 3
        %s259 = smul.u32 64, %s258
        %v261 = vld [vmem:[%s223] sm:$0xff]
        %v262 = vld [vmem:[%s223 + $0x8] sm:$0xf]
        %v263 = vld [vmem:[%s223 + $0xc] sm:$0xff]
        %v264 = vld [vmem:[%s223 + $0x14] sm:$0xf]
        %v265 = vld [vmem:[%s223 + $0x18] sm:$0x77]
        %v266 = vld [vmem:[%s223 + $0x20] sm:$0x7]
        %v267 = vld [vmem:[%s1] sm:$0xf]
        %v268 = vld [vmem:[%s2] sm:$0xff]
        %270 = vset.pattern.permute.xlu0 0
        %271 = vperm.xlu0 %270, %v268
        %v272 = vpop.permute.xlu0 %271
        %v280 = vunpack.c.l.b16 %v261
        %v281 = vunpack.c.h.b16 %v261
        %v282 = vunpack.c.l.b16 %v262
        %v283 = vunpack.c.l.b16 %v263
        %v284 = vunpack.c.h.b16 %v263
        %v285 = vunpack.c.l.b16 %v264
        %v286 = vunpack.c.l.b16 %v265
        %v287 = vunpack.c.h.b16 %v265
        %v288 = vunpack.c.l.b16 %v266
        %v289 = vpack.c.b16 %v283, %v280
        %v290 = vpack.c.b16 %v284, %v281
        %v291 = vpack.c.b16 %v285, %v282
        %v292 = vpack.c.b16 %v286, %v286
        %v293 = vpack.c.b16 %v287, %v287
        %v294 = vpack.c.b16 %v288, %v288
        %vm298 = vcmask 179200
        %v300 = vsel %vm298, %v267, 0
        %vm302 = vcmask 1042432
        %v304 = vsel %vm302, %v292, 0
        %v307 = vsel %vm302, %v293, 0
        %v310 = vsel %vm302, %v294, 0
        %312 = vmatprep.subr.bf16.mxu0 %v290
        %313 = vmatpush1.bf16.msra.mxu0 %v289
        %314 = vmatprep.subr.bf16.mxu0 %v307
        %315 = vmatpush1.bf16.msra.mxu0 %v304
        %316 = vmatprep.subr.bf16.mxu0 0
        %317 = vmatpush1.bf16.msra.mxu0 0
        %318 = vmatprep.subr.bf16.mxu0 0
        %319 = vmatpush1.bf16.msra.mxu0 0
        %320 = vmatprep.subr.bf16.mxu0 0
        %321 = vmatpush1.bf16.msra.mxu0 0
        %322 = vmatprep.subr.bf16.mxu0 0
        %323 = vmatpush1.bf16.msra.mxu0 0
        %324 = vmatprep.subr.bf16.mxu0 0
        %325 = vmatpush1.bf16.msra.mxu0 0
        %326 = vmatprep.subr.bf16.mxu0 0
        %327 = vmatpush1.bf16.msra.mxu0 0
        %328 = vmatprep.subr.bf16.mxu0 0
        %329 = vmatpush1.bf16.msra.mxu0 0
        %330 = vmatprep.subr.bf16.mxu0 0
        %331 = vmatpush1.bf16.msra.mxu0 0
        %332 = vmatprep.subr.bf16.mxu0 0
        %333 = vmatpush1.bf16.msra.mxu0 0
        %334 = vmatprep.subr.bf16.mxu0 0
        %335 = vmatpush1.bf16.msra.mxu0 0
        %336 = vmatprep.subr.bf16.mxu0 0
        %337 = vmatpush1.bf16.msra.mxu0 0
        %338 = vmatprep.subr.bf16.mxu0 0
        %339 = vmatpush1.bf16.msra.mxu0 0
        %340 = vmatprep.subr.bf16.mxu0 0
        %341 = vmatpush1.bf16.msra.mxu0 0
        %342 = vmatprep.subr.bf16.mxu0 0
        %343 = vmatpush1.bf16.msra.mxu0 0
        %344 = vmatprep.mubr.bf16.mxu0 0
        %345 = vmatmul.mubr.bf16.gmra.mrb[0].mxu0 %v300
        %v346 = vpop.f32.mrb[0].mxu0
        %v347 = vadd.f32 %v272, %v346
        %v348 = vpop.f32.mrb[0].mxu0
        %v349 = vadd.f32 %v272, %v348
        %v350 = vpop.f32.mrb[0].mxu0
        %v351 = vpop.f32.mrb[0].mxu0
        %352 = vdwg.mxu0
        %353 = vmatprep.subr.bf16.mxu0 0
        %354 = vmatpush1.bf16.msra.mxu0 %v291
        %355 = vmatprep.subr.bf16.mxu0 0
        %356 = vmatpush1.bf16.msra.mxu0 %v310
        %357 = vmatprep.subr.bf16.mxu0 0
        %358 = vmatpush1.bf16.msra.mxu0 0
        %359 = vmatprep.subr.bf16.mxu0 0
        %360 = vmatpush1.bf16.msra.mxu0 0
        %361 = vmatprep.subr.bf16.mxu0 0
        %362 = vmatpush1.bf16.msra.mxu0 0
        %363 = vmatprep.subr.bf16.mxu0 0
        %364 = vmatpush1.bf16.msra.mxu0 0
        %365 = vmatprep.subr.bf16.mxu0 0
        %366 = vmatpush1.bf16.msra.mxu0 0
        %367 = vmatprep.subr.bf16.mxu0 0
        %368 = vmatpush1.bf16.msra.mxu0 0
        %369 = vmatprep.subr.bf16.mxu0 0
        %370 = vmatpush1.bf16.msra.mxu0 0
        %371 = vmatprep.subr.bf16.mxu0 0
        %372 = vmatpush1.bf16.msra.mxu0 0
        %373 = vmatprep.subr.bf16.mxu0 0
        %374 = vmatpush1.bf16.msra.mxu0 0
        %375 = vmatprep.subr.bf16.mxu0 0
        %376 = vmatpush1.bf16.msra.mxu0 0
        %377 = vmatprep.subr.bf16.mxu0 0
        %378 = vmatpush1.bf16.msra.mxu0 0
        %379 = vmatprep.subr.bf16.mxu0 0
        %380 = vmatpush1.bf16.msra.mxu0 0
        %381 = vmatprep.subr.bf16.mxu0 0
        %382 = vmatpush1.bf16.msra.mxu0 0
        %383 = vmatprep.subr.bf16.mxu0 0
        %384 = vmatpush1.bf16.msra.mxu0 0
        %385 = vmatprep.mubr.bf16.mxu0 0
        %386 = vmatmul.mubr.bf16.gmra.mrb[0].mxu0 %v300
        %v387 = vpop.f32.mrb[0].mxu0
        %v388 = vadd.f32 %v272, %v387
        %v389 = vpop.f32.mrb[0].mxu0
        %v390 = vpop.f32.mrb[0].mxu0
        %v391 = vpop.f32.mrb[0].mxu0
        %392 = vdwg.mxu0
        %v393 = vmax.f32 %v347, 0.0
        %v394 = vmax.f32 %v349, 0.0
        %v395 = vmax.f32 %v388, 0.0
        %v396 = vld [vmem:[%s3] sm:$0x3f]
        %v397 = vld [vmem:[%s4] sm:$0x3f]
        %399 = vset.pattern.permute.xlu0 0
        %400 = vperm.xlu0 %399, %v397
        %v401 = vpop.permute.xlu0 %400
        %vm403 = vcmask 64512
        %v405 = vsel %vm403, %v396, 0
        %407 = vmatprep.subr.mxu0 %v394
        %408 = vmatpush1.msra.mxu0 %v393
        %409 = vmatprep.subr.mxu0 0.0
        %410 = vmatpush1.msra.mxu0 0.0
        %411 = vmatprep.subr.mxu0 0.0
        %412 = vmatpush1.msra.mxu0 0.0
        %413 = vmatprep.subr.mxu0 0.0
        %414 = vmatpush1.msra.mxu0 0.0
        %415 = vmatprep.subr.mxu0 0.0
        %416 = vmatpush1.msra.mxu0 0.0
        %417 = vmatprep.subr.mxu0 0.0
        %418 = vmatpush1.msra.mxu0 0.0
        %419 = vmatprep.subr.mxu0 0.0
        %420 = vmatpush1.msra.mxu0 0.0
        %421 = vmatprep.subr.mxu0 0.0
        %422 = vmatpush1.msra.mxu0 0.0
        %423 = vmatprep.subr.mxu0 0.0
        %424 = vmatpush1.msra.mxu0 0.0
        %425 = vmatprep.subr.mxu0 0.0
        %426 = vmatpush1.msra.mxu0 0.0
        %427 = vmatprep.subr.mxu0 0.0
        %428 = vmatpush1.msra.mxu0 0.0
        %429 = vmatprep.subr.mxu0 0.0
        %430 = vmatpush1.msra.mxu0 0.0
        %431 = vmatprep.subr.mxu0 0.0
        %432 = vmatpush1.msra.mxu0 0.0
        %433 = vmatprep.subr.mxu0 0.0
        %434 = vmatpush1.msra.mxu0 0.0
        %435 = vmatprep.subr.mxu0 0.0
        %436 = vmatpush1.msra.mxu0 0.0
        %437 = vmatprep.subr.mxu0 0.0
        %438 = vmatpush1.msra.mxu0 0.0
        %439 = vmatprep.subr.mxu0 0.0
        %440 = vmatpush1.msra.mxu0 0.0
        %441 = vmatprep.subr.mxu0 0.0
        %442 = vmatpush1.msra.mxu0 0.0
        %443 = vmatprep.subr.mxu0 0.0
        %444 = vmatpush1.msra.mxu0 0.0
        %445 = vmatprep.subr.mxu0 0.0
        %446 = vmatpush1.msra.mxu0 0.0
        %447 = vmatprep.subr.mxu0 0.0
        %448 = vmatpush1.msra.mxu0 0.0
        %449 = vmatprep.subr.mxu0 0.0
        %450 = vmatpush1.msra.mxu0 0.0
        %451 = vmatprep.subr.mxu0 0.0
        %452 = vmatpush1.msra.mxu0 0.0
        %453 = vmatprep.subr.mxu0 0.0
        %454 = vmatpush1.msra.mxu0 0.0
        %455 = vmatprep.subr.mxu0 0.0
        %456 = vmatpush1.msra.mxu0 0.0
        %457 = vmatprep.subr.mxu0 0.0
        %458 = vmatpush1.msra.mxu0 0.0
        %459 = vmatprep.subr.mxu0 0.0
        %460 = vmatpush1.msra.mxu0 0.0
        %461 = vmatprep.subr.mxu0 0.0
        %462 = vmatpush1.msra.mxu0 0.0
        %463 = vmatprep.subr.mxu0 0.0
        %464 = vmatpush1.msra.mxu0 0.0
        %465 = vmatprep.subr.mxu0 0.0
        %466 = vmatpush1.msra.mxu0 0.0
        %467 = vmatprep.subr.mxu0 0.0
        %468 = vmatpush1.msra.mxu0 0.0
        %469 = vmatprep.subr.mxu0 0.0
        %470 = vmatpush1.msra.mxu0 0.0
        %471 = vmatprep.mubr.f32.mxu0 0.0
        %472 = vmatmul.mubr.f32.gmra.mrb[0].mxu0 %v405
        %v473 = vpop.f32.mrb[0].mxu0
        %v474 = vadd.f32 %v401, %v473
        %v475 = vpop.f32.mrb[0].mxu0
        %v476 = vadd.f32 %v401, %v475
        %477 = vdwg.mxu0
        %478 = vmatprep.subr.mxu0 0.0
        %479 = vmatpush1.msra.mxu0 %v395
        %480 = vmatprep.subr.mxu0 0.0
        %481 = vmatpush1.msra.mxu0 0.0
        %482 = vmatprep.subr.mxu0 0.0
        %483 = vmatpush1.msra.mxu0 0.0
        %484 = vmatprep.subr.mxu0 0.0
        %485 = vmatpush1.msra.mxu0 0.0
        %486 = vmatprep.subr.mxu0 0.0
        %487 = vmatpush1.msra.mxu0 0.0
        %488 = vmatprep.subr.mxu0 0.0
        %489 = vmatpush1.msra.mxu0 0.0
        %490 = vmatprep.subr.mxu0 0.0
        %491 = vmatpush1.msra.mxu0 0.0
        %492 = vmatprep.subr.mxu0 0.0
        %493 = vmatpush1.msra.mxu0 0.0
        %494 = vmatprep.subr.mxu0 0.0
        %495 = vmatpush1.msra.mxu0 0.0
        %496 = vmatprep.subr.mxu0 0.0
        %497 = vmatpush1.msra.mxu0 0.0
        %498 = vmatprep.subr.mxu0 0.0
        %499 = vmatpush1.msra.mxu0 0.0
        %500 = vmatprep.subr.mxu0 0.0
        %501 = vmatpush1.msra.mxu0 0.0
        %502 = vmatprep.subr.mxu0 0.0
        %503 = vmatpush1.msra.mxu0 0.0
        %504 = vmatprep.subr.mxu0 0.0
        %505 = vmatpush1.msra.mxu0 0.0
        %506 = vmatprep.subr.mxu0 0.0
        %507 = vmatpush1.msra.mxu0 0.0
        %508 = vmatprep.subr.mxu0 0.0
        %509 = vmatpush1.msra.mxu0 0.0
        %510 = vmatprep.subr.mxu0 0.0
        %511 = vmatpush1.msra.mxu0 0.0
        %512 = vmatprep.subr.mxu0 0.0
        %513 = vmatpush1.msra.mxu0 0.0
        %514 = vmatprep.subr.mxu0 0.0
        %515 = vmatpush1.msra.mxu0 0.0
        %516 = vmatprep.subr.mxu0 0.0
        %517 = vmatpush1.msra.mxu0 0.0
        %518 = vmatprep.subr.mxu0 0.0
        %519 = vmatpush1.msra.mxu0 0.0
        %520 = vmatprep.subr.mxu0 0.0
        %521 = vmatpush1.msra.mxu0 0.0
        %522 = vmatprep.subr.mxu0 0.0
        %523 = vmatpush1.msra.mxu0 0.0
        %524 = vmatprep.subr.mxu0 0.0
        %525 = vmatpush1.msra.mxu0 0.0
        %526 = vmatprep.subr.mxu0 0.0
        %527 = vmatpush1.msra.mxu0 0.0
        %528 = vmatprep.subr.mxu0 0.0
        %529 = vmatpush1.msra.mxu0 0.0
        %530 = vmatprep.subr.mxu0 0.0
        %531 = vmatpush1.msra.mxu0 0.0
        %532 = vmatprep.subr.mxu0 0.0
        %533 = vmatpush1.msra.mxu0 0.0
        %534 = vmatprep.subr.mxu0 0.0
        %535 = vmatpush1.msra.mxu0 0.0
        %536 = vmatprep.subr.mxu0 0.0
        %537 = vmatpush1.msra.mxu0 0.0
        %538 = vmatprep.subr.mxu0 0.0
        %539 = vmatpush1.msra.mxu0 0.0
        %540 = vmatprep.subr.mxu0 0.0
        %541 = vmatpush1.msra.mxu0 0.0
        %542 = vmatprep.mubr.f32.mxu0 0.0
        %543 = vmatmul.mubr.f32.gmra.mrb[0].mxu0 %v405
        %v544 = vpop.f32.mrb[0].mxu0
        %v545 = vadd.f32 %v401, %v544
        %v546 = vpop.f32.mrb[0].mxu0
        %547 = vdwg.mxu0
        %vm548 = vcmp.gt.f32.partialorder %v474, 0.0
        %vm549 = vcmp.gt.f32.partialorder %v476, 0.0
        %vm550 = vcmp.gt.f32.partialorder %v545, 0.0
        %v551 = vmul.f32 %v474, 0.01
        %v552 = vmul.f32 %v476, 0.01
        %v553 = vmul.f32 %v545, 0.01
        %v554 = vsel %vm548, %v474, %v551
        %v555 = vsel %vm549, %v476, %v552
        %v556 = vsel %vm550, %v545, %v553
        %v557 = vpack.c.bf16 %v554, %v554
        %v558 = vpack.c.bf16 %v555, %v555
        %v559 = vpack.c.bf16 %v556, %v556
        %v563 = vunpack.c.l.b16 %v557
        %v564 = vunpack.c.l.b16 %v558
        %v565 = vunpack.c.l.b16 %v559
        %v566 = vpack.c.b16 %v564, %v563
        %v567 = vpack.c.b16 %v565, %v565
        %570 = vst [vmem:[%s249] sm:$0x77] %v566
        %571 = vst [vmem:[%s249 + $0x8] sm:$0x7] %v567
        %s572 = sand.u32 %s140, 1
        %s573 = scalar_lea.sflag [#allocation4], %s572
        %s574 = sand.u32 %s140, 1
        %s575 = smul.addr %s574, 12
        %s576 = scalar_lea.vmem [#allocation5], %s575
        // Predicated region
        $region45: #{tpu_custom_call.1} parent=39 // pred_check
          %p577 = pneg %p150
        $region46: #{tpu_custom_call.1} parent=39 // pred_check_branch
          %579 = sbr.rel (%p577) target = $region48
        $region47: #{tpu_custom_call.1} parent=39 // pred_region
          %s580 = smul.u32 3, %s22
          %s581 = ssub.s32 5, %s580
          %p582 = scmp.lt.s32.totalorder %s581, 3
          %s583 = scalar_select %p582, %s581, 3
          %s584 = smul.u32 64, %s583
          %s586 = ssub.s32 192, %s584
          %587 = vsyncadd %s573, %s586
          %p588 = scmp.ne.s32.totalorder 0, %s584
          %s589 = smul.addr %s580, 64
          %s590 = scalar_lea.hbm %s5, %s589
          %s591 = smul.u32 %s583, 4
          %s592 = sshll.u32 %s591, 4
          %s593 = sshll.u32 %s576, 4
          %s594 = int_to_ptr.vmem [resolvable:$true] %s593
          %596 = dma.vmem_to_hbm [thread:$0]  (%p588), %s594, %s592, %s590, %s573
        $region48: #{tpu_custom_call.1} parent=39 // pred_fallthru
          _
      $region40: #{tpu_custom_call.1} parent=5 // pred_fallthru
        _
      %p597 = scmp.le.s32.totalorder 2, %s17
      // Predicated region
      $region49: #{tpu_custom_call.1} parent=5 // pred_check
        %p598 = pneg %p597
      $region50: #{tpu_custom_call.1} parent=5 // pred_check_branch
        %600 = sbr.rel (%p598) target = $region52
      $region51: #{tpu_custom_call.1} parent=5 // pred_region
        %s601 = ssub.s32 %s17, 2
        // Predicated region
        $region53: #{tpu_custom_call.1} parent=51 // pred_check
          %p602 = pneg %p156
        $region54: #{tpu_custom_call.1} parent=51 // pred_check_branch
          %604 = sbr.rel (%p602) target = $region56
        $region55: #{tpu_custom_call.1} parent=51 // pred_region
          %s605 = sand.u32 %s141, 1
          %s606 = scalar_lea.sflag [#allocation4], %s605
          %s607 = sand.u32 %s141, 1
          %s608 = smul.addr %s607, 12
          %s609 = scalar_lea.vmem [#allocation5], %s608
          %610 = dma.done %s606, 192
        $region56: #{tpu_custom_call.1} parent=51 // pred_fallthru
          _
      $region52: #{tpu_custom_call.1} parent=5 // pred_fallthru
        _
    $region6: #{tpu_custom_call.1} parent=1 // loop_footer
      %s21 = sadd.s32 1, %s17
    $region7: #{tpu_custom_call.1} parent=1 // loop_footer_branch
      %16 = sbr.rel target = $region3
    $region8: #{tpu_custom_call.1} parent=1 // loop_exit
      _
    %611 = vsyncpa [#allocation3], 1
    %s612 = scalar_lea.sflag [#allocation3], 1
    %613 = vsyncpa %s612, 1
    %614 = vsyncpa [#allocation4], 1
    %s615 = scalar_lea.sflag [#allocation4], 1
    %616 = vsyncpa %s615, 1

</llo_original>
